<compile_context>
chip_gen: v7x
topology: tpu7x:2x2x1
jax: 0.10.0
libtpu: 0.0.40
codegen_flags: <defaults>
</compile_context>

<pallas_src>
import numpy as np
import jax
import jax.numpy as jnp
from jax.experimental import pallas as pl
from jax.experimental.pallas import tpu as pltpu

# ----------------------------- hyper-parameters -----------------------------
VOC_SIZE = 50
EMB_DIM = 16
N_AUTHORS = 5
WINDOW_SIZE = 36
OUT_CHANNELS = (16, 16, 16)
KERNEL_SIZES = (3, 4, 5)
TEMPORAL_MAX = 8
N_FEATURES = 8
BATCH = 2

TEMPORAL_FEATURES = WINDOW_SIZE // TEMPORAL_MAX            # 4
C_SUM = sum(OUT_CHANNELS)                                  # 48
LINEAR_SIZE = TEMPORAL_FEATURES * C_SUM                    # 192
K_MAX = max(KERNEL_SIZES)                                  # 5
K_IN = TEMPORAL_FEATURES * K_MAX * EMB_DIM                 # 320 (im2col width)

MAX_BB = 32   # batch block: M = BB*8 = 256 rows per grid step

# im2col gather positions, built directly in (r, pool-window t, tap) order so
# the gathered data is already laid out as x2d[b*8 + r, t*80 + tap*16 + e]
# and NO transpose is needed in the wrapper.
_POS2 = (np.arange(TEMPORAL_MAX)[:, None, None]
         + np.arange(TEMPORAL_FEATURES)[None, :, None] * TEMPORAL_MAX
         + np.arange(K_MAX)[None, None, :]
         ).reshape(TEMPORAL_MAX, TEMPORAL_FEATURES * K_MAX)
assert int(_POS2.max()) < WINDOW_SIZE          # 35 < 36: all taps stay in-window


# --------------------------------- kernel -----------------------------------
def make_kernel(BB):
    """BB = batch block handled per grid step (static)."""

    def kernel(x_ref, wc_ref, wl_ref, wo_ref, out_ref):
        # x_ref  : (BB*8, 320)  bf16 im2col'd embeddings
        # wc_ref : (321, 192)   bf16 block-diag conv weight | bias row
        # wl_ref : (193, 8)     bf16 linear1 weight | bias row
        # wo_ref : (9, 5)       bf16 linear2 weight | bias row
        # out_ref: (BB, 5)      f32  log-probs
        x = x_ref[...]                                             # (BB*8, 320)

        # All 3 conv branches x all 4 pool windows in ONE bf16 MXU matmul
        # (f32 accumulation); columns come out in pooled-feature order.
        conv = jnp.dot(x, wc_ref[0:K_IN, :],
                       preferred_element_type=jnp.float32)         # (BB*8, 192)
        act = jnp.maximum(
            conv + wc_ref[K_IN:K_IN + 1, :].astype(jnp.float32), 0.0)

        # Temporal max-pool: reshape only splits the leading dim (free), then a
        # single sublane reduce over the 8 rows of each batch item.
        feats = jnp.max(act.reshape(BB, TEMPORAL_MAX, LINEAR_SIZE), axis=1)

        # linear1 + ReLU (bf16 operands, f32 accumulation / elementwise)
        h = jnp.maximum(
            jnp.dot(feats.astype(jnp.bfloat16), wl_ref[0:LINEAR_SIZE, :],
                    preferred_element_type=jnp.float32)
            + wl_ref[LINEAR_SIZE:LINEAR_SIZE + 1, :].astype(jnp.float32), 0.0)

        # linear2 + ReLU
        o = jnp.maximum(
            jnp.dot(h.astype(jnp.bfloat16), wo_ref[0:N_FEATURES, :],
                    preferred_element_type=jnp.float32)
            + wo_ref[N_FEATURES:N_FEATURES + 1, :].astype(jnp.float32), 0.0)

        # log_softmax along authors (f32)
        m = jnp.max(o, axis=-1, keepdims=True)
        lse = m + jnp.log(jnp.sum(jnp.exp(o - m), axis=-1, keepdims=True))
        out_ref[...] = o - lse

    return kernel


# -------------------- one-time parameter re-layout (hoisted) -----------------
def prepare_params(p):
    """Runs ONCE; the per-call forward only consumes the packed bf16 arrays."""
    # Fused conv weight: taps zero-padded to K_MAX, branch channels concatenated.
    w_taps = jnp.zeros((K_MAX, EMB_DIM, C_SUM), jnp.float32)
    off = 0
    for i, (c, k) in enumerate(zip(OUT_CHANNELS, KERNEL_SIZES)):
        w = jnp.transpose(p[f"conv_w{i + 1}"][:, 0], (1, 2, 0))    # (k, E, c)
        w_taps = w_taps.at[:k, :, off:off + c].set(w)
        off += c
    w_fused = w_taps.reshape(K_MAX * EMB_DIM, C_SUM)               # (80, 48)
    # Block-diagonal over the 4 pool windows -> (320, 192).
    w_conv = jnp.kron(jnp.eye(TEMPORAL_FEATURES, dtype=jnp.float32), w_fused)
    b_conv = jnp.tile(
        jnp.concatenate([p["conv_b1"], p["conv_b2"], p["conv_b3"]]),
        TEMPORAL_FEATURES)                                         # (192,)
    wc_pack = jnp.concatenate([w_conv, b_conv[None, :]], axis=0)   # (321, 192)

    # linear1: reorder columns from PyTorch's (c*TF + t) to our (t*C_SUM + c).
    wl = p["lin_w"].reshape(N_FEATURES, C_SUM, TEMPORAL_FEATURES)
    wl = wl.transpose(2, 1, 0).reshape(LINEAR_SIZE, N_FEATURES)    # (192, 8)
    wl_pack = jnp.concatenate([wl, p["lin_b"][None, :]], axis=0)   # (193, 8)

    wo_pack = jnp.concatenate([p["lin2_w"].T, p["lin2_b"][None, :]],
                              axis=0)                              # (9, 5)

    # bf16 storage halves HBM->VMEM bytes; all kernel dots accumulate in f32.
    return dict(emb=p["emb"].astype(jnp.bfloat16),
                wc=wc_pack.astype(jnp.bfloat16),
                wl=wl_pack.astype(jnp.bfloat16),
                wo=wo_pack.astype(jnp.bfloat16))


# -------------------------------- wrapper ------------------------------------
@jax.jit
def cnn3c_forward(x_ids, packed):
    B = x_ids.shape[0]

    # Embedding lookup (data-dependent gather) + im2col kept as plain-JAX glue.
    # bf16 table keeps the (inherently inflated) im2col stream in bf16, and the
    # (r, t, tap)-ordered gather avoids any transpose afterwards.
    emb = jnp.take(packed["emb"], x_ids, axis=0)                   # (B, 36, 16)
    xw = emb[:, _POS2, :].reshape(B, TEMPORAL_MAX, K_IN)           # (B, 8, 320)

    # Batch blocking: BB*8 rows per grid step (256 when BB=32, full MXU height).
    # For B > MAX_BB the grid has several "parallel" steps, which shards across
    # the two v7x TensorCores; small batches stay in a single step.
    BB = B if B <= MAX_BB else MAX_BB
    Bp = ((B + BB - 1) // BB) * BB
    if Bp != B:
        xw = jnp.pad(xw, ((0, Bp - B), (0, 0), (0, 0)))
    x2d = xw.reshape(Bp * TEMPORAL_MAX, K_IN)                      # (Bp*8, 320)

    const2 = lambda i: (0, 0)
    out = pl.pallas_call(
        make_kernel(BB),
        out_shape=jax.ShapeDtypeStruct((Bp, N_AUTHORS), jnp.float32),
        grid_spec=pltpu.PrefetchScalarGridSpec(
            num_scalar_prefetch=0,
            grid=(Bp // BB,),
            in_specs=[
                pl.BlockSpec((BB * TEMPORAL_MAX, K_IN), lambda i: (i, 0)),
                # Constant index_map -> weight blocks fetched once, not per step.
                pl.BlockSpec((K_IN + 1, LINEAR_SIZE), const2),
                pl.BlockSpec((LINEAR_SIZE + 1, N_FEATURES), const2),
                pl.BlockSpec((N_FEATURES + 1, N_AUTHORS), const2),
            ],
            out_specs=pl.BlockSpec((BB, N_AUTHORS), lambda i: (i, 0)),
        ),
        compiler_params=pltpu.CompilerParams(
            dimension_semantics=("parallel",),
            # Let XLA fuse the gather/im2col producer into the x operand.
            allow_input_fusion=[True, False, False, False],
        ),
    )(x2d, packed["wc"], packed["wl"], packed["wo"])

    return out[:B]                                                  # (B, N_AUTHORS)


# ------------------------- pure-JAX reference (checks) -----------------------
def cnn3c_reference(x_ids, p):
    B = x_ids.shape[0]
    emb = jnp.take(p["emb"], x_ids, axis=0)                # (B, W, E) f32

    def conv_branch(w, b, k):
        L = WINDOW_SIZE - k + 1
        out = jnp.zeros((B, w.shape[0], L), jnp.float32)
        for dk in range(k):
            out = out + jnp.einsum("ble,ce->bcl", emb[:, dk:dk + L, :], w[:, 0, dk, :])
        return jax.nn.relu(out + b[None, :, None])

    def pool(o):
        tfn = o.shape[-1] // TEMPORAL_MAX
        return o[..., :tfn * TEMPORAL_MAX].reshape(
            o.shape[0], o.shape[1], tfn, TEMPORAL_MAX).max(-1)

    m1 = pool(conv_branch(p["conv_w1"], p["conv_b1"], KERNEL_SIZES[0]))
    m2 = pool(conv_branch(p["conv_w2"], p["conv_b2"], KERNEL_SIZES[1]))
    m3 = pool(conv_branch(p["conv_w3"], p["conv_b3"], KERNEL_SIZES[2]))
    cat = jnp.concatenate([m1, m2, m3], axis=1).reshape(B, LINEAR_SIZE)
    h = jax.nn.relu(cat @ p["lin_w"].T + p["lin_b"])
    o = jax.nn.relu(h @ p["lin2_w"].T + p["lin2_b"])
    return jax.nn.log_softmax(o, axis=1)


# ----------------------------------- main ------------------------------------
def init_params(key):
    ks = jax.random.split(key, 11)
    p = {"emb": jax.random.normal(ks[0], (VOC_SIZE, EMB_DIM), jnp.float32) * 0.1}
    for i, (c, k) in enumerate(zip(OUT_CHANNELS, KERNEL_SIZES)):
        p[f"conv_w{i+1}"] = jax.random.normal(ks[1 + 2 * i], (c, 1, k, EMB_DIM), jnp.float32) * 0.1
        p[f"conv_b{i+1}"] = jax.random.normal(ks[2 + 2 * i], (c,), jnp.float32) * 0.1
    p["lin_w"] = jax.random.normal(ks[7], (N_FEATURES, LINEAR_SIZE), jnp.float32) * 0.1
    p["lin_b"] = jax.random.normal(ks[8], (N_FEATURES,), jnp.float32) * 0.1
    p["lin2_w"] = jax.random.normal(ks[9], (N_AUTHORS, N_FEATURES), jnp.float32) * 0.1
    p["lin2_b"] = jax.random.normal(ks[10], (N_AUTHORS,), jnp.float32) * 0.1
    return p


if __name__ == "__main__":
    key = jax.random.PRNGKey(0)
    pkey, xkey = jax.random.split(key)
    params = init_params(pkey)
    packed = prepare_params(params)      # one-time re-layout + bf16 cast (hoisted)
    x = jax.random.randint(xkey, (BATCH, WINDOW_SIZE), 0, VOC_SIZE, dtype=jnp.int32)

    out = jax.block_until_ready(cnn3c_forward(x, packed))

    ref = jax.block_until_ready(cnn3c_reference(x, params))
    # bf16 storage of embeddings/weights (f32 accumulation) -> loosened tolerance.
    np.testing.assert_allclose(np.asarray(out), np.asarray(ref), rtol=1e-2, atol=1e-2)

    print("KERNEL_OK")
</pallas_src>

<mosaic_0001>
module attributes {stable_mosaic.version = 11 : i64} {
  func.func @kernel(%arg0: i32, %arg1: memref<16x320xbf16, #tpu.memory_space<vmem>>, %arg2: memref<321x192xbf16, #tpu.memory_space<vmem>>, %arg3: memref<193x8xbf16, #tpu.memory_space<vmem>>, %arg4: memref<9x5xbf16, #tpu.memory_space<vmem>>, %arg5: memref<2x5xf32, #tpu.memory_space<vmem>>) attributes {dimension_semantics = [#tpu.dimension_semantics<parallel>], iteration_bounds = array<i64: 1>, scalar_prefetch = 0 : i64, scratch_operands = 0 : i64, tpu.core_type = #tpu.core_type<tc>, window_params = [{transform_indices = @transform_0, window_bounds = array<i64: 16, 320>}, {pipeline_mode = #tpu.pipeline_mode<synchronous>, transform_indices = @transform_1, window_bounds = array<i64: 321, 192>}, {pipeline_mode = #tpu.pipeline_mode<synchronous>, transform_indices = @transform_2, window_bounds = array<i64: 193, 8>}, {pipeline_mode = #tpu.pipeline_mode<synchronous>, transform_indices = @transform_3, window_bounds = array<i64: 9, 5>}, {transform_indices = @transform_4, window_bounds = array<i64: 2, 5>}]} {
    %c0 = arith.constant 0 : index
    %c0_0 = arith.constant 0 : index
    %0 = vector.load %arg1[%c0, %c0_0] : memref<16x320xbf16, #tpu.memory_space<vmem>>, vector<16x320xbf16>
    %c0_1 = arith.constant 0 : index
    %c0_2 = arith.constant 0 : index
    %1 = vector.load %arg2[%c0_1, %c0_2] : memref<321x192xbf16, #tpu.memory_space<vmem>>, vector<320x192xbf16>
    %cst = arith.constant dense<0.000000e+00> : vector<16x192xf32>
    %2 = tpu.matmul %0, %1, %cst {dimension_numbers = #tpu.dot_dimension_numbers<[1], [0], [0], [1], [0, 0, 1, 1], [], []>} : vector<16x320xbf16>, vector<320x192xbf16>, vector<16x192xf32> -> vector<16x192xf32>
    %c320 = arith.constant 320 : index
    %c0_3 = arith.constant 0 : index
    %3 = vector.load %arg2[%c320, %c0_3] : memref<321x192xbf16, #tpu.memory_space<vmem>>, vector<1x192xbf16>
    %4 = arith.extf %3 : vector<1x192xbf16> to vector<1x192xf32>
    %5 = vector.broadcast %4 : vector<1x192xf32> to vector<16x192xf32>
    %6 = arith.addf %2, %5 : vector<16x192xf32>
    %cst_4 = arith.constant 0.000000e+00 : f32
    %7 = vector.broadcast %cst_4 : f32 to vector<16x192xf32>
    %8 = arith.maximumf %6, %7 : vector<16x192xf32>
    %9 = vector.shape_cast %8 : vector<16x192xf32> to vector<2x8x192xf32>
    %cst_5 = arith.constant dense<0xFF800000> : vector<2x192xf32>
    %10 = vector.multi_reduction <maximumf>, %9, %cst_5 [1] : vector<2x8x192xf32> to vector<2x192xf32>
    %11 = arith.truncf %10 : vector<2x192xf32> to vector<2x192xbf16>
    %c0_6 = arith.constant 0 : index
    %c0_7 = arith.constant 0 : index
    %12 = vector.load %arg3[%c0_6, %c0_7] : memref<193x8xbf16, #tpu.memory_space<vmem>>, vector<192x8xbf16>
    %cst_8 = arith.constant dense<0.000000e+00> : vector<2x8xf32>
    %13 = tpu.matmul %11, %12, %cst_8 {dimension_numbers = #tpu.dot_dimension_numbers<[1], [0], [0], [1], [0, 0, 1, 1], [], []>} : vector<2x192xbf16>, vector<192x8xbf16>, vector<2x8xf32> -> vector<2x8xf32>
    %c192 = arith.constant 192 : index
    %c0_9 = arith.constant 0 : index
    %14 = vector.load %arg3[%c192, %c0_9] : memref<193x8xbf16, #tpu.memory_space<vmem>>, vector<1x8xbf16>
    %15 = arith.extf %14 : vector<1x8xbf16> to vector<1x8xf32>
    %16 = vector.broadcast %15 : vector<1x8xf32> to vector<2x8xf32>
    %17 = arith.addf %13, %16 : vector<2x8xf32>
    %cst_10 = arith.constant 0.000000e+00 : f32
    %18 = vector.broadcast %cst_10 : f32 to vector<2x8xf32>
    %19 = arith.maximumf %17, %18 : vector<2x8xf32>
    %20 = arith.truncf %19 : vector<2x8xf32> to vector<2x8xbf16>
    %c0_11 = arith.constant 0 : index
    %c0_12 = arith.constant 0 : index
    %21 = vector.load %arg4[%c0_11, %c0_12] : memref<9x5xbf16, #tpu.memory_space<vmem>>, vector<8x5xbf16>
    %cst_13 = arith.constant dense<0.000000e+00> : vector<2x5xf32>
    %22 = tpu.matmul %20, %21, %cst_13 {dimension_numbers = #tpu.dot_dimension_numbers<[1], [0], [0], [1], [0, 0, 1, 1], [], []>} : vector<2x8xbf16>, vector<8x5xbf16>, vector<2x5xf32> -> vector<2x5xf32>
    %c8 = arith.constant 8 : index
    %c0_14 = arith.constant 0 : index
    %23 = vector.load %arg4[%c8, %c0_14] : memref<9x5xbf16, #tpu.memory_space<vmem>>, vector<1x5xbf16>
    %24 = arith.extf %23 : vector<1x5xbf16> to vector<1x5xf32>
    %25 = vector.broadcast %24 : vector<1x5xf32> to vector<2x5xf32>
    %26 = arith.addf %22, %25 : vector<2x5xf32>
    %cst_15 = arith.constant 0.000000e+00 : f32
    %27 = vector.broadcast %cst_15 : f32 to vector<2x5xf32>
    %28 = arith.maximumf %26, %27 : vector<2x5xf32>
    %cst_16 = arith.constant dense<0xFF800000> : vector<2xf32>
    %29 = vector.multi_reduction <maximumf>, %28, %cst_16 [1] : vector<2x5xf32> to vector<2xf32>
    %30 = vector.shape_cast %29 : vector<2xf32> to vector<2x1xf32>
    %31 = vector.broadcast %30 : vector<2x1xf32> to vector<2x5xf32>
    %32 = arith.subf %28, %31 : vector<2x5xf32>
    %33 = math.exp %32 : vector<2x5xf32>
    %cst_17 = arith.constant dense<0.000000e+00> : vector<2xf32>
    %34 = vector.multi_reduction <add>, %33, %cst_17 [1] : vector<2x5xf32> to vector<2xf32>
    %35 = vector.shape_cast %34 : vector<2xf32> to vector<2x1xf32>
    %36 = math.log %35 : vector<2x1xf32>
    %37 = arith.addf %30, %36 : vector<2x1xf32>
    %38 = vector.broadcast %37 : vector<2x1xf32> to vector<2x5xf32>
    %39 = arith.subf %28, %38 : vector<2x5xf32>
    %c0_18 = arith.constant 0 : index
    %c0_19 = arith.constant 0 : index
    %40 = vector.load %arg5[%c0_18, %c0_19] : memref<2x5xf32, #tpu.memory_space<vmem>>, vector<2x5xf32>
    tpu.vector_store %arg5[%c0_18, %c0_19], %39 {strides = array<i32>} : memref<2x5xf32, #tpu.memory_space<vmem>>, vector<2x5xf32>,
    return
  }
  func.func @transform_0(%arg0: i32) -> (i32, i32) {
    %c0_i32 = arith.constant 0 : i32
    %c0_i32_0 = arith.constant 0 : i32
    return %arg0, %c0_i32 : i32, i32
  }
  func.func @transform_1(%arg0: i32) -> (i32, i32) {
    %c0_i32 = arith.constant 0 : i32
    %c0_i32_0 = arith.constant 0 : i32
    %c0_i32_1 = arith.constant 0 : i32
    return %c0_i32, %c0_i32_0 : i32, i32
  }
  func.func @transform_2(%arg0: i32) -> (i32, i32) {
    %c0_i32 = arith.constant 0 : i32
    %c0_i32_0 = arith.constant 0 : i32
    %c0_i32_1 = arith.constant 0 : i32
    return %c0_i32, %c0_i32_0 : i32, i32
  }
  func.func @transform_3(%arg0: i32) -> (i32, i32) {
    %c0_i32 = arith.constant 0 : i32
    %c0_i32_0 = arith.constant 0 : i32
    %c0_i32_1 = arith.constant 0 : i32
    return %c0_i32, %c0_i32_0 : i32, i32
  }
  func.func @transform_4(%arg0: i32) -> (i32, i32) {
    %c0_i32 = arith.constant 0 : i32
    %c0_i32_0 = arith.constant 0 : i32
    return %arg0, %c0_i32 : i32, i32
  }
}

</mosaic_0001>

<llo_original>
// kernel: cnn3c_forward.1
$region0: #{cnn3c_forward.1}
  #allocation0 [shape = 'u32[]', space=smem, size = 0x4, offset = 0x4, fixed_abs, tag = 'smem constant byte address 0x4 - core index']
  #allocation1 [shape = 'u32[144,128]{1,0:T(1,128)}', space=vmem, size = 0x12000, scoped, tag = 'internal scratch']
  %s0 = inlined_call_operand.vmem [shape: bf16[16,320], index: 0, kind: input, shape index: {}]
  %s1 = inlined_call_operand.vmem [shape: bf16[321,192], index: 1, kind: input, shape index: {}]
  %s2 = inlined_call_operand.vmem [shape: bf16[193,8], index: 2, kind: input, shape index: {}]
  %s3 = inlined_call_operand.vmem [shape: bf16[9,5], index: 3, kind: input, shape index: {}]
  %s4 = inlined_call_operand.hbm [shape: f32[2,5], index: 4, kind: output, shape index: {}]
  %s5 = sld [smem:[#allocation0]]
  $region26: #{cnn3c_forward.1} parent=0
    _
  %s7 = ssub.s32 1, %s5
  %s8 = scalar_select 0, %s7, %s5
  $region1: #{cnn3c_forward.1} parent=0
    #allocation2 [shape = 'u8[1024]{0}', space=vmem, size = 0x400, scoped, tag = 'output window, operand 0, single buffered']
    #allocation3 [shape = 's32[1]{0}', space=sflag, size = 0x4, scoped, tag = 'scoped memory for cnn3c_forward.1']
    %9 = vsyncpa [#allocation3], 0
    // Predicated region
    $region2: #{cnn3c_forward.1} parent=1 // pred_check
      _
    $region3: #{cnn3c_forward.1} parent=1 // pred_check_branch
      %11 = sbr.rel (0) target = $region5
    $region4: #{cnn3c_forward.1} parent=1 // pred_region
      _
    $region5: #{cnn3c_forward.1} parent=1 // pred_fallthru
      _
    // Predicated region
    $region6: #{cnn3c_forward.1} parent=1 // pred_check
      _
    $region7: #{cnn3c_forward.1} parent=1 // pred_check_branch
      %13 = sbr.rel (0) target = $region9
    $region8: #{cnn3c_forward.1} parent=1 // pred_region
      _
    $region9: #{cnn3c_forward.1} parent=1 // pred_fallthru
      _
    // Predicated region
    $region10: #{cnn3c_forward.1} parent=1 // pred_check
      _
    $region11: #{cnn3c_forward.1} parent=1 // pred_check_branch
      %15 = sbr.rel (0) target = $region13
    $region12: #{cnn3c_forward.1} parent=1 // pred_region
      _
    $region13: #{cnn3c_forward.1} parent=1 // pred_fallthru
      _
    // Predicated region
    $region14: #{cnn3c_forward.1} parent=1 // pred_check
      _
    $region15: #{cnn3c_forward.1} parent=1 // pred_check_branch
      %17 = sbr.rel (0) target = $region17
    $region16: #{cnn3c_forward.1} parent=1 // pred_region
      _
    $region17: #{cnn3c_forward.1} parent=1 // pred_fallthru
      _
    %v19 = vld [vmem:[%s0] sm:$0xff]
    %v20 = vld [vmem:[%s0 + $0x8] sm:$0xf]
    %v21 = vld [vmem:[%s0 + $0xc] sm:$0xff]
    %v22 = vld [vmem:[%s0 + $0x14] sm:$0xf]
    %v23 = vld [vmem:[%s1] sm:$0xff]
    %v24 = vld [vmem:[%s1 + $0x8] sm:$0xff]
    %v25 = vld [vmem:[%s1 + $0x10] sm:$0xff]
    %v26 = vld [vmem:[%s1 + $0x18] sm:$0xff]
    %v27 = vld [vmem:[%s1 + $0x20] sm:$0xff]
    %v28 = vld [vmem:[%s1 + $0x28] sm:$0xff]
    %v29 = vld [vmem:[%s1 + $0x30] sm:$0xff]
    %v30 = vld [vmem:[%s1 + $0x38] sm:$0xff]
    %v31 = vld [vmem:[%s1 + $0x40] sm:$0xff]
    %v32 = vld [vmem:[%s1 + $0x48] sm:$0xff]
    %v33 = vld [vmem:[%s1 + $0x50] sm:$0xff]
    %v34 = vld [vmem:[%s1 + $0x58] sm:$0xff]
    %v35 = vld [vmem:[%s1 + $0x60] sm:$0xff]
    %v36 = vld [vmem:[%s1 + $0x68] sm:$0xff]
    %v37 = vld [vmem:[%s1 + $0x70] sm:$0xff]
    %v38 = vld [vmem:[%s1 + $0x78] sm:$0xff]
    %v39 = vld [vmem:[%s1 + $0x80] sm:$0xff]
    %v40 = vld [vmem:[%s1 + $0x88] sm:$0xff]
    %v41 = vld [vmem:[%s1 + $0x90] sm:$0xff]
    %v42 = vld [vmem:[%s1 + $0x98] sm:$0xff]
    %v43 = vld [vmem:[%s1 + $0xa0] sm:$0xff]
    %v44 = vld [vmem:[%s1 + $0xa8] sm:$0xff]
    %v45 = vld [vmem:[%s1 + $0xb0] sm:$0xff]
    %v46 = vld [vmem:[%s1 + $0xb8] sm:$0xff]
    %v47 = vld [vmem:[%s1 + $0xc0] sm:$0xff]
    %v48 = vld [vmem:[%s1 + $0xc8] sm:$0xff]
    %v49 = vld [vmem:[%s1 + $0xd0] sm:$0xff]
    %v50 = vld [vmem:[%s1 + $0xd8] sm:$0xff]
    %v51 = vld [vmem:[%s1 + $0xe0] sm:$0xff]
    %v52 = vld [vmem:[%s1 + $0xe8] sm:$0xff]
    %v53 = vld [vmem:[%s1 + $0xf0] sm:$0xff]
    %v54 = vld [vmem:[%s1 + $0xf8] sm:$0xff]
    %v55 = vld [vmem:[%s1 + $0x100] sm:$0xff]
    %v56 = vld [vmem:[%s1 + $0x108] sm:$0xff]
    %v57 = vld [vmem:[%s1 + $0x110] sm:$0xff]
    %v58 = vld [vmem:[%s1 + $0x118] sm:$0xff]
    %v59 = vld [vmem:[%s1 + $0x120] sm:$0xff]
    %v60 = vld [vmem:[%s1 + $0x128] sm:$0xff]
    %v61 = vld [vmem:[%s1 + $0x130] sm:$0xff]
    %v62 = vld [vmem:[%s1 + $0x138] sm:$0xff]
    %v63 = vld [vmem:[%s1 + $0x140] sm:$0x11]
    %v64 = vunpack.c.l.bf16 %v63
    %v65 = vunpack.c.h.bf16 %v63
    %v66 = vlaneseq
    %v67 = vshrl.u32 %v66, 7
    %v68 = vsub.s32 0, %v67
    %v69 = vrot.slane %v64, %v68
    %v70 = vlaneseq
    %v71 = vshrl.u32 %v70, 7
    %v72 = vsub.s32 0, %v71
    %v73 = vrot.slane %v65, %v72
    %v78 = vunpack.c.l.b16 %v19
    %v79 = vunpack.c.h.b16 %v19
    %v80 = vunpack.c.l.b16 %v20
    %v81 = vunpack.c.l.b16 %v21
    %v82 = vunpack.c.h.b16 %v21
    %v83 = vunpack.c.l.b16 %v22
    %v84 = vpack.c.b16 %v81, %v78
    %v85 = vpack.c.b16 %v82, %v79
    %v86 = vpack.c.b16 %v83, %v80
    %v129 = vunpack.c.l.b16 %v23
    %v130 = vunpack.c.h.b16 %v23
    %v131 = vunpack.c.l.b16 %v24
    %v132 = vunpack.c.h.b16 %v24
    %v133 = vunpack.c.l.b16 %v25
    %v134 = vunpack.c.h.b16 %v25
    %v135 = vunpack.c.l.b16 %v26
    %v136 = vunpack.c.h.b16 %v26
    %v137 = vunpack.c.l.b16 %v27
    %v138 = vunpack.c.h.b16 %v27
    %v139 = vunpack.c.l.b16 %v28
    %v140 = vunpack.c.h.b16 %v28
    %v141 = vunpack.c.l.b16 %v29
    %v142 = vunpack.c.h.b16 %v29
    %v143 = vunpack.c.l.b16 %v30
    %v144 = vunpack.c.h.b16 %v30
    %v145 = vunpack.c.l.b16 %v31
    %v146 = vunpack.c.h.b16 %v31
    %v147 = vunpack.c.l.b16 %v32
    %v148 = vunpack.c.h.b16 %v32
    %v149 = vunpack.c.l.b16 %v33
    %v150 = vunpack.c.h.b16 %v33
    %v151 = vunpack.c.l.b16 %v34
    %v152 = vunpack.c.h.b16 %v34
    %v153 = vunpack.c.l.b16 %v35
    %v154 = vunpack.c.h.b16 %v35
    %v155 = vunpack.c.l.b16 %v36
    %v156 = vunpack.c.h.b16 %v36
    %v157 = vunpack.c.l.b16 %v37
    %v158 = vunpack.c.h.b16 %v37
    %v159 = vunpack.c.l.b16 %v38
    %v160 = vunpack.c.h.b16 %v38
    %v161 = vunpack.c.l.b16 %v39
    %v162 = vunpack.c.h.b16 %v39
    %v163 = vunpack.c.l.b16 %v40
    %v164 = vunpack.c.h.b16 %v40
    %v165 = vunpack.c.l.b16 %v41
    %v166 = vunpack.c.h.b16 %v41
    %v167 = vunpack.c.l.b16 %v42
    %v168 = vunpack.c.h.b16 %v42
    %v169 = vunpack.c.l.b16 %v43
    %v170 = vunpack.c.h.b16 %v43
    %v171 = vunpack.c.l.b16 %v44
    %v172 = vunpack.c.h.b16 %v44
    %v173 = vunpack.c.l.b16 %v45
    %v174 = vunpack.c.h.b16 %v45
    %v175 = vunpack.c.l.b16 %v46
    %v176 = vunpack.c.h.b16 %v46
    %v177 = vunpack.c.l.b16 %v47
    %v178 = vunpack.c.h.b16 %v47
    %v179 = vunpack.c.l.b16 %v48
    %v180 = vunpack.c.h.b16 %v48
    %v181 = vunpack.c.l.b16 %v49
    %v182 = vunpack.c.h.b16 %v49
    %v183 = vunpack.c.l.b16 %v50
    %v184 = vunpack.c.h.b16 %v50
    %v185 = vunpack.c.l.b16 %v51
    %v186 = vunpack.c.h.b16 %v51
    %v187 = vunpack.c.l.b16 %v52
    %v188 = vunpack.c.h.b16 %v52
    %v189 = vunpack.c.l.b16 %v53
    %v190 = vunpack.c.h.b16 %v53
    %v191 = vunpack.c.l.b16 %v54
    %v192 = vunpack.c.h.b16 %v54
    %v193 = vunpack.c.l.b16 %v55
    %v194 = vunpack.c.h.b16 %v55
    %v195 = vunpack.c.l.b16 %v56
    %v196 = vunpack.c.h.b16 %v56
    %v197 = vunpack.c.l.b16 %v57
    %v198 = vunpack.c.h.b16 %v57
    %v199 = vunpack.c.l.b16 %v58
    %v200 = vunpack.c.h.b16 %v58
    %v201 = vunpack.c.l.b16 %v59
    %v202 = vunpack.c.h.b16 %v59
    %v203 = vunpack.c.l.b16 %v60
    %v204 = vunpack.c.h.b16 %v60
    %v205 = vunpack.c.l.b16 %v61
    %v206 = vunpack.c.h.b16 %v61
    %v207 = vunpack.c.l.b16 %v62
    %v208 = vunpack.c.h.b16 %v62
    %v209 = vpack.c.b16 %v131, %v129
    %v210 = vpack.c.b16 %v132, %v130
    %v211 = vpack.c.b16 %v135, %v133
    %v212 = vpack.c.b16 %v136, %v134
    %v213 = vpack.c.b16 %v139, %v137
    %v214 = vpack.c.b16 %v140, %v138
    %v215 = vpack.c.b16 %v143, %v141
    %v216 = vpack.c.b16 %v144, %v142
    %v217 = vpack.c.b16 %v147, %v145
    %v218 = vpack.c.b16 %v148, %v146
    %v219 = vpack.c.b16 %v151, %v149
    %v220 = vpack.c.b16 %v152, %v150
    %v221 = vpack.c.b16 %v155, %v153
    %v222 = vpack.c.b16 %v156, %v154
    %v223 = vpack.c.b16 %v159, %v157
    %v224 = vpack.c.b16 %v160, %v158
    %v225 = vpack.c.b16 %v163, %v161
    %v226 = vpack.c.b16 %v164, %v162
    %v227 = vpack.c.b16 %v167, %v165
    %v228 = vpack.c.b16 %v168, %v166
    %v229 = vpack.c.b16 %v171, %v169
    %v230 = vpack.c.b16 %v172, %v170
    %v231 = vpack.c.b16 %v175, %v173
    %v232 = vpack.c.b16 %v176, %v174
    %v233 = vpack.c.b16 %v179, %v177
    %v234 = vpack.c.b16 %v180, %v178
    %v235 = vpack.c.b16 %v183, %v181
    %v236 = vpack.c.b16 %v184, %v182
    %v237 = vpack.c.b16 %v187, %v185
    %v238 = vpack.c.b16 %v188, %v186
    %v239 = vpack.c.b16 %v191, %v189
    %v240 = vpack.c.b16 %v192, %v190
    %v241 = vpack.c.b16 %v195, %v193
    %v242 = vpack.c.b16 %v196, %v194
    %v243 = vpack.c.b16 %v199, %v197
    %v244 = vpack.c.b16 %v200, %v198
    %v245 = vpack.c.b16 %v203, %v201
    %v246 = vpack.c.b16 %v204, %v202
    %v247 = vpack.c.b16 %v207, %v205
    %v248 = vpack.c.b16 %v208, %v206
    %vm289 = vcmask 523264
    %v291 = vsel %vm289, %v86, 0
    %293 = vmatprep.subr.bf16.mxu0 %v210
    %294 = vmatpush1.bf16.msra.mxu0 %v209
    %295 = vmatprep.subr.bf16.mxu0 %v212
    %296 = vmatpush1.bf16.msra.mxu0 %v211
    %297 = vmatprep.subr.bf16.mxu0 %v214
    %298 = vmatpush1.bf16.msra.mxu0 %v213
    %299 = vmatprep.subr.bf16.mxu0 %v216
    %300 = vmatpush1.bf16.msra.mxu0 %v215
    %301 = vmatprep.subr.bf16.mxu0 %v218
    %302 = vmatpush1.bf16.msra.mxu0 %v217
    %303 = vmatprep.subr.bf16.mxu0 %v220
    %304 = vmatpush1.bf16.msra.mxu0 %v219
    %305 = vmatprep.subr.bf16.mxu0 %v222
    %306 = vmatpush1.bf16.msra.mxu0 %v221
    %307 = vmatprep.subr.bf16.mxu0 %v224
    %308 = vmatpush1.bf16.msra.mxu0 %v223
    %309 = vmatprep.subr.bf16.mxu0 %v226
    %310 = vmatpush1.bf16.msra.mxu0 %v225
    %311 = vmatprep.subr.bf16.mxu0 %v228
    %312 = vmatpush1.bf16.msra.mxu0 %v227
    %313 = vmatprep.subr.bf16.mxu0 %v230
    %314 = vmatpush1.bf16.msra.mxu0 %v229
    %315 = vmatprep.subr.bf16.mxu0 %v232
    %316 = vmatpush1.bf16.msra.mxu0 %v231
    %317 = vmatprep.subr.bf16.mxu0 %v234
    %318 = vmatpush1.bf16.msra.mxu0 %v233
    %319 = vmatprep.subr.bf16.mxu0 %v236
    %320 = vmatpush1.bf16.msra.mxu0 %v235
    %321 = vmatprep.subr.bf16.mxu0 %v238
    %322 = vmatpush1.bf16.msra.mxu0 %v237
    %323 = vmatprep.subr.bf16.mxu0 %v240
    %324 = vmatpush1.bf16.msra.mxu0 %v239
    %325 = vmatprep.mubr.bf16.mxu0 %v85
    %326 = vmatmul.mubr.bf16.gmra.mrb[0].mxu0 %v84
    %v327 = vpop.f32.mrb[0].mxu0
    %v328 = vadd.f32 %v69, %v327
    %v329 = vpop.f32.mrb[0].mxu0
    %v330 = vadd.f32 %v73, %v329
    %v331 = vpop.f32.mrb[0].mxu0
    %v332 = vadd.f32 %v69, %v331
    %v333 = vpop.f32.mrb[0].mxu0
    %v334 = vadd.f32 %v73, %v333
    %335 = vdwg.mxu0
    %336 = vmatprep.subr.bf16.mxu0 %v242
    %337 = vmatpush1.bf16.msra.mxu0 %v241
    %338 = vmatprep.subr.bf16.mxu0 %v244
    %339 = vmatpush1.bf16.msra.mxu0 %v243
    %340 = vmatprep.subr.bf16.mxu0 %v246
    %341 = vmatpush1.bf16.msra.mxu0 %v245
    %342 = vmatprep.subr.bf16.mxu0 %v248
    %343 = vmatpush1.bf16.msra.mxu0 %v247
    %344 = vmatprep.subr.bf16.mxu0 0
    %345 = vmatpush1.bf16.msra.mxu0 0
    %346 = vmatprep.subr.bf16.mxu0 0
    %347 = vmatpush1.bf16.msra.mxu0 0
    %348 = vmatprep.subr.bf16.mxu0 0
    %349 = vmatpush1.bf16.msra.mxu0 0
    %350 = vmatprep.subr.bf16.mxu0 0
    %351 = vmatpush1.bf16.msra.mxu0 0
    %352 = vmatprep.subr.bf16.mxu0 0
    %353 = vmatpush1.bf16.msra.mxu0 0
    %354 = vmatprep.subr.bf16.mxu0 0
    %355 = vmatpush1.bf16.msra.mxu0 0
    %356 = vmatprep.subr.bf16.mxu0 0
    %357 = vmatpush1.bf16.msra.mxu0 0
    %358 = vmatprep.subr.bf16.mxu0 0
    %359 = vmatpush1.bf16.msra.mxu0 0
    %360 = vmatprep.subr.bf16.mxu0 0
    %361 = vmatpush1.bf16.msra.mxu0 0
    %362 = vmatprep.subr.bf16.mxu0 0
    %363 = vmatpush1.bf16.msra.mxu0 0
    %364 = vmatprep.subr.bf16.mxu0 0
    %365 = vmatpush1.bf16.msra.mxu0 0
    %366 = vmatprep.subr.bf16.mxu0 0
    %367 = vmatpush1.bf16.msra.mxu0 0
    %368 = vmatprep.mubr.bf16.mxu0 0
    %369 = vmatmul.mubr.bf16.gmra.mrb[0].mxu0 %v291
    %v370 = vpop.f32.mrb[0].mxu0
    %v371 = vadd.f32 %v328, %v370
    %v372 = vpop.f32.mrb[0].mxu0
    %v373 = vadd.f32 %v330, %v372
    %v374 = vpop.f32.mrb[0].mxu0
    %v375 = vadd.f32 %v332, %v374
    %v376 = vpop.f32.mrb[0].mxu0
    %v377 = vadd.f32 %v334, %v376
    %378 = vdwg.mxu0
    %v379 = vmax.f32 %v371, 0.0
    %v380 = vmax.f32 %v373, 0.0
    %v381 = vmax.f32 %v375, 0.0
    %v382 = vmax.f32 %v377, 0.0
    %v383 = vrot.slane %v379, 4
    %v384 = vmax.f32 %v379, %v383
    %v385 = vrot.slane %v384, 2
    %v386 = vmax.f32 %v384, %v385
    %v387 = vrot.slane %v386, 1
    %v388 = vmax.f32 %v386, %v387
    %v389 = vsel %vm289, %v380, -inf
    %v390 = vrot.slane %v389, 4
    %v391 = vmax.f32 %v389, %v390
    %v392 = vrot.slane %v391, 2
    %v393 = vmax.f32 %v391, %v392
    %v394 = vrot.slane %v393, 1
    %v395 = vmax.f32 %v393, %v394
    %v396 = vrot.slane %v381, 4
    %v397 = vmax.f32 %v381, %v396
    %v398 = vrot.slane %v397, 2
    %v399 = vmax.f32 %v397, %v398
    %v400 = vrot.slane %v399, 1
    %v401 = vmax.f32 %v399, %v400
    %v402 = vsel %vm289, %v382, -inf
    %v403 = vrot.slane %v402, 4
    %v404 = vmax.f32 %v402, %v403
    %v405 = vrot.slane %v404, 2
    %v406 = vmax.f32 %v404, %v405
    %v407 = vrot.slane %v406, 1
    %v408 = vmax.f32 %v406, %v407
    %v409 = vpack.c.bf16 %v388, %v388
    %v410 = vpack.c.bf16 %v395, %v395
    %v411 = vpack.c.bf16 %v401, %v401
    %v412 = vpack.c.bf16 %v408, %v408
    %v413 = vld [vmem:[%s2] sm:$0xf]
    %v414 = vld [vmem:[%s2 + $0x4] sm:$0xf]
    %v415 = vld [vmem:[%s2 + $0x8] sm:$0xf]
    %v416 = vld [vmem:[%s2 + $0xc] sm:$0xf]
    %v417 = vld [vmem:[%s2 + $0x10] sm:$0xf]
    %v418 = vld [vmem:[%s2 + $0x14] sm:$0xf]
    %v419 = vld [vmem:[%s2 + $0x18] sm:$0xf]
    %v420 = vld [vmem:[%s2 + $0x1c] sm:$0xf]
    %v421 = vld [vmem:[%s2 + $0x20] sm:$0xf]
    %v422 = vld [vmem:[%s2 + $0x24] sm:$0xf]
    %v423 = vld [vmem:[%s2 + $0x28] sm:$0xf]
    %v424 = vld [vmem:[%s2 + $0x2c] sm:$0xf]
    %v425 = vld [vmem:[%s2 + $0x30] sm:$0xf]
    %v426 = vld [vmem:[%s2 + $0x34] sm:$0xf]
    %v427 = vld [vmem:[%s2 + $0x38] sm:$0xf]
    %v428 = vld [vmem:[%s2 + $0x3c] sm:$0xf]
    %v429 = vld [vmem:[%s2 + $0x40] sm:$0xf]
    %v430 = vld [vmem:[%s2 + $0x44] sm:$0xf]
    %v431 = vld [vmem:[%s2 + $0x48] sm:$0xf]
    %v432 = vld [vmem:[%s2 + $0x4c] sm:$0xf]
    %v433 = vld [vmem:[%s2 + $0x50] sm:$0xf]
    %v434 = vld [vmem:[%s2 + $0x54] sm:$0xf]
    %v435 = vld [vmem:[%s2 + $0x58] sm:$0xf]
    %v436 = vld [vmem:[%s2 + $0x5c] sm:$0xf]
    %v437 = vld [vmem:[%s2 + $0x60] sm:$0x1]
    %v438 = vunpack.c.l.bf16 %v437
    %v439 = vlaneseq
    %v440 = vshrl.u32 %v439, 7
    %v441 = vsub.s32 0, %v440
    %v442 = vrot.slane %v438, %v441
    %v447 = vunpack.c.l.b16 %v409
    %v448 = vunpack.c.l.b16 %v410
    %v449 = vunpack.c.l.b16 %v411
    %v450 = vunpack.c.l.b16 %v412
    %vm451 = vcmask 1041409
    %v452 = vsel %vm451, %v449, %v447
    %v453 = vsel %vm451, %v450, %v448
    %v454 = vpack.c.b16 %v452, %v452
    %v455 = vpack.c.b16 %v453, %v453
    %v481 = vunpack.c.l.b16 %v413
    %v482 = vunpack.c.l.b16 %v414
    %v483 = vunpack.c.l.b16 %v415
    %v484 = vunpack.c.l.b16 %v416
    %v485 = vunpack.c.l.b16 %v417
    %v486 = vunpack.c.l.b16 %v418
    %v487 = vunpack.c.l.b16 %v419
    %v488 = vunpack.c.l.b16 %v420
    %v489 = vunpack.c.l.b16 %v421
    %v490 = vunpack.c.l.b16 %v422
    %v491 = vunpack.c.l.b16 %v423
    %v492 = vunpack.c.l.b16 %v424
    %v493 = vunpack.c.l.b16 %v425
    %v494 = vunpack.c.l.b16 %v426
    %v495 = vunpack.c.l.b16 %v427
    %v496 = vunpack.c.l.b16 %v428
    %v497 = vunpack.c.l.b16 %v429
    %v498 = vunpack.c.l.b16 %v430
    %v499 = vunpack.c.l.b16 %v431
    %v500 = vunpack.c.l.b16 %v432
    %v501 = vunpack.c.l.b16 %v433
    %v502 = vunpack.c.l.b16 %v434
    %v503 = vunpack.c.l.b16 %v435
    %v504 = vunpack.c.l.b16 %v436
    %v505 = vpack.c.b16 %v482, %v481
    %v506 = vpack.c.b16 %v484, %v483
    %v507 = vpack.c.b16 %v486, %v485
    %v508 = vpack.c.b16 %v488, %v487
    %v509 = vpack.c.b16 %v490, %v489
    %v510 = vpack.c.b16 %v492, %v491
    %v511 = vpack.c.b16 %v494, %v493
    %v512 = vpack.c.b16 %v496, %v495
    %v513 = vpack.c.b16 %v498, %v497
    %v514 = vpack.c.b16 %v500, %v499
    %v515 = vpack.c.b16 %v502, %v501
    %v516 = vpack.c.b16 %v504, %v503
    %v530 = vsel %vm289, %v455, 0
    %532 = vmatprep.subr.bf16.mxu0 0
    %533 = vmatpush1.bf16.msra.mxu0 %v505
    %534 = vmatprep.subr.bf16.mxu0 0
    %535 = vmatpush1.bf16.msra.mxu0 %v506
    %536 = vmatprep.subr.bf16.mxu0 0
    %537 = vmatpush1.bf16.msra.mxu0 %v507
    %538 = vmatprep.subr.bf16.mxu0 0
    %539 = vmatpush1.bf16.msra.mxu0 %v508
    %540 = vmatprep.subr.bf16.mxu0 0
    %541 = vmatpush1.bf16.msra.mxu0 %v509
    %542 = vmatprep.subr.bf16.mxu0 0
    %543 = vmatpush1.bf16.msra.mxu0 %v510
    %544 = vmatprep.subr.bf16.mxu0 0
    %545 = vmatpush1.bf16.msra.mxu0 %v511
    %546 = vmatprep.subr.bf16.mxu0 0
    %547 = vmatpush1.bf16.msra.mxu0 %v512
    %548 = vmatprep.subr.bf16.mxu0 0
    %549 = vmatpush1.bf16.msra.mxu0 %v513
    %550 = vmatprep.subr.bf16.mxu0 0
    %551 = vmatpush1.bf16.msra.mxu0 %v514
    %552 = vmatprep.subr.bf16.mxu0 0
    %553 = vmatpush1.bf16.msra.mxu0 %v515
    %554 = vmatprep.subr.bf16.mxu0 0
    %555 = vmatpush1.bf16.msra.mxu0 %v516
    %556 = vmatprep.subr.bf16.mxu0 0
    %557 = vmatpush1.bf16.msra.mxu0 0
    %558 = vmatprep.subr.bf16.mxu0 0
    %559 = vmatpush1.bf16.msra.mxu0 0
    %560 = vmatprep.subr.bf16.mxu0 0
    %561 = vmatpush1.bf16.msra.mxu0 0
    %562 = vmatprep.subr.bf16.mxu0 0
    %563 = vmatpush1.bf16.msra.mxu0 0
    %564 = vmatprep.mubr.bf16.mxu0 %v530
    %565 = vmatmul.mubr.bf16.gmra.mrb[0].mxu0 %v454
    %v566 = vpop.f32.mrb[0].mxu0
    %v567 = vadd.f32 %v442, %v566
    %v568 = vpop.f32.mrb[0].mxu0
    %v569 = vpop.f32.mrb[0].mxu0
    %v570 = vpop.f32.mrb[0].mxu0
    %571 = vdwg.mxu0
    %v572 = vmax.f32 %v567, 0.0
    %v573 = vpack.c.bf16 %v572, %v572
    %v574 = vld [vmem:[%s3] sm:$0xf]
    %v575 = vld [vmem:[%s3 + $0x4] sm:$0x1]
    %v576 = vunpack.c.l.bf16 %v575
    %v577 = vlaneseq
    %v578 = vshrl.u32 %v577, 7
    %v579 = vsub.s32 0, %v578
    %v580 = vrot.slane %v576, %v579
    %vm581 = vcmask 64512
    %v583 = vsel %vm581, %v573, 0
    %vm585 = vcmask 1043456
    %v587 = vsel %vm585, %v574, 0
    %589 = vmatprep.subr.bf16.mxu0 0
    %590 = vmatpush1.bf16.msra.mxu0 %v587
    %591 = vmatprep.subr.bf16.mxu0 0
    %592 = vmatpush1.bf16.msra.mxu0 0
    %593 = vmatprep.subr.bf16.mxu0 0
    %594 = vmatpush1.bf16.msra.mxu0 0
    %595 = vmatprep.subr.bf16.mxu0 0
    %596 = vmatpush1.bf16.msra.mxu0 0
    %597 = vmatprep.subr.bf16.mxu0 0
    %598 = vmatpush1.bf16.msra.mxu0 0
    %599 = vmatprep.subr.bf16.mxu0 0
    %600 = vmatpush1.bf16.msra.mxu0 0
    %601 = vmatprep.subr.bf16.mxu0 0
    %602 = vmatpush1.bf16.msra.mxu0 0
    %603 = vmatprep.subr.bf16.mxu0 0
    %604 = vmatpush1.bf16.msra.mxu0 0
    %605 = vmatprep.subr.bf16.mxu0 0
    %606 = vmatpush1.bf16.msra.mxu0 0
    %607 = vmatprep.subr.bf16.mxu0 0
    %608 = vmatpush1.bf16.msra.mxu0 0
    %609 = vmatprep.subr.bf16.mxu0 0
    %610 = vmatpush1.bf16.msra.mxu0 0
    %611 = vmatprep.subr.bf16.mxu0 0
    %612 = vmatpush1.bf16.msra.mxu0 0
    %613 = vmatprep.subr.bf16.mxu0 0
    %614 = vmatpush1.bf16.msra.mxu0 0
    %615 = vmatprep.subr.bf16.mxu0 0
    %616 = vmatpush1.bf16.msra.mxu0 0
    %617 = vmatprep.subr.bf16.mxu0 0
    %618 = vmatpush1.bf16.msra.mxu0 0
    %619 = vmatprep.subr.bf16.mxu0 0
    %620 = vmatpush1.bf16.msra.mxu0 0
    %621 = vmatprep.mubr.bf16.mxu0 0
    %622 = vmatmul.mubr.bf16.gmra.mrb[0].mxu0 %v583
    %v623 = vpop.f32.mrb[0].mxu0
    %v624 = vadd.f32 %v580, %v623
    %v625 = vpop.f32.mrb[0].mxu0
    %v626 = vpop.f32.mrb[0].mxu0
    %v627 = vpop.f32.mrb[0].mxu0
    %628 = vdwg.mxu0
    %v629 = vmax.f32 %v624, 0.0
    %vm630 = vcmask 33792
    %v631 = vsel %vm630, %v629, -inf
    %632 = vmax.xlane.f32.xlu0 %v631
    %v633 = vpop.xlane.xlu0 %632
    %v634 = vsub.f32 %v629, %v633
    %v635 = vmul.f32 %v634, 1.442695
    %v636 = vpow.pop %v635
    %v637 = vsel %vm630, %v636, 0.0
    %638 = vadd.xlane.f32.xlu0 %v637
    %v639 = vpop.xlane.xlu0 %638
    %v640 = vlog2.pop %v639
    %v641 = vmul.f32 %v640, 0.6931472
    %v642 = vadd.f32 %v633, %v641
    %v643 = vsub.f32 %v629, %v642
    %644 = vst.msk [vmem:[#allocation2] sm:$0x3] %vm630, %v643
    // Predicated region
    $region18: #{cnn3c_forward.1} parent=1 // pred_check
      _
    $region19: #{cnn3c_forward.1} parent=1 // pred_check_branch
      %646 = sbr.rel (0) target = $region21
    $region20: #{cnn3c_forward.1} parent=1 // pred_region
      %s648 = ssub.s32 32, 32
      %649 = vsyncadd [#allocation3], %s648
      %s651 = sshll.u32 [#allocation2], 4
      %s652 = int_to_ptr.vmem [resolvable:$true] %s651
      %654 = dma.vmem_to_hbm [thread:$0]  %s652, 32, %s4, [#allocation3]
    $region21: #{cnn3c_forward.1} parent=1 // pred_fallthru
      _
    // Predicated region
    $region22: #{cnn3c_forward.1} parent=1 // pred_check
      _
    $region23: #{cnn3c_forward.1} parent=1 // pred_check_branch
      %656 = sbr.rel (0) target = $region25
    $region24: #{cnn3c_forward.1} parent=1 // pred_region
      %657 = dma.done [#allocation3], 32
    $region25: #{cnn3c_forward.1} parent=1 // pred_fallthru
      _
    %658 = vsyncpa [#allocation3], 1

</llo_original>
